<compile_context>
chip_gen: v6e
topology: v6e:2x2x1
jax: 0.10.0
libtpu: 0.0.40
codegen_flags: <defaults>
</compile_context>

<pallas_src>
import jax
import jax.numpy as jnp
from jax import lax
from jax.experimental import pallas as pl
from jax.experimental.pallas import tpu as pltpu

H1, H2 = 400, 300          # logical hidden sizes (match the PyTorch module)
H1P, H2P = 512, 384        # lane-padded hidden sizes (multiples of 128)


def _critic_kernel(state_ref, action_ref,
                   w1_ref, b1_ref,
                   w2s_ref, w2a_ref, b2_ref,
                   w3_ref, b3_ref,
                   out_ref):
    # Cast MXU operands to bf16 (weights are already bf16); accumulate in f32.
    s_bf = state_ref[...].astype(jnp.bfloat16)
    a_bf = action_ref[...].astype(jnp.bfloat16)

    # fc1 + ReLU   (TM, S) @ (S, H1P) -> f32
    h1 = jnp.dot(s_bf, w1_ref[...],
                 preferred_element_type=jnp.float32) + b1_ref[...]
    h1 = jnp.maximum(h1, 0.0)

    # fc2 over concat(h1, action) + ReLU, concat folded into two matmuls.
    h2 = (jnp.dot(h1.astype(jnp.bfloat16), w2s_ref[...],
                  preferred_element_type=jnp.float32)
          + jnp.dot(a_bf, w2a_ref[...],
                    preferred_element_type=jnp.float32)
          + b2_ref[...])
    h2 = jnp.maximum(h2, 0.0)

    # fc3 (out_features == 1): contract the (1, H2P) f32 weight row against
    # the last dim of h2 -> lane-dense (1, TM) result (batch on the lane axis)
    # so the output writeback is a full unmasked vst, not a 1-lane vst.msk.
    y = lax.dot_general(w3_ref[...], h2,
                        dimension_numbers=(((1,), (1,)), ((), ())),
                        preferred_element_type=jnp.float32)      # (1, TM)
    out_ref[...] = y + b3_ref[0, 0]


def critic_forward(state, action, params):
    """state: (B, state_dim) f32, action: (B, action_dim) f32 -> (B, 1) f32."""
    w1, b1, w2s, w2a, b2, w3, b3 = params
    B, state_dim = state.shape
    action_dim = action.shape[1]

    # Big batch tiles: amortise per-grid-step overhead and reuse the resident
    # RHS weights across many LHS rows.  Partial last tiles are masked by
    # Pallas; TM=B (<=1024) is a single full-extent block.
    TM = min(B, 1024)
    grid = (pl.cdiv(B, TM),)

    const = lambda shape: pl.BlockSpec(shape, lambda i: (0, 0))

    flops = 2 * B * (state_dim * H1P + H1P * H2P + action_dim * H2P + H2P)
    bytes_accessed = (state.size * 4 + action.size * 4 + B * 4
                      + w1.size * 2 + w2s.size * 2 + w2a.size * 2
                      + b1.size * 4 + b2.size * 4 + w3.size * 4 + 4)

    out = pl.pallas_call(
        _critic_kernel,
        out_shape=jax.ShapeDtypeStruct((1, B), jnp.float32),
        grid=grid,
        in_specs=[
            pl.BlockSpec((TM, state_dim), lambda i: (i, 0)),   # state tile
            pl.BlockSpec((TM, action_dim), lambda i: (i, 0)),  # action tile
            const(w1.shape), const(b1.shape),                  # VMEM-resident
            const(w2s.shape), const(w2a.shape), const(b2.shape),
            const(w3.shape),
            pl.BlockSpec(memory_space=pltpu.MemorySpace.SMEM),  # b3 scalar
        ],
        out_specs=pl.BlockSpec((1, TM), lambda i: (0, i)),     # lane-dense out
        compiler_params=pltpu.CompilerParams(
            dimension_semantics=("parallel",)),
        # TODO(synk): if v7x profiling shows single-TC occupancy, switch the
        # batch axis to pltpu.CORE_PARALLEL so both TensorCores split tiles.
        cost_estimate=pl.CostEstimate(flops=flops, transcendentals=0,
                                      bytes_accessed=bytes_accessed),
    )(state, action, w1, b1, w2s, w2a, b2, w3, b3)

    return out.reshape(B, 1)


def init_critic_params(key, state_dim, action_dim):
    """Init mirroring the PyTorch module (fc1/fc2: xavier_uniform_ weights,
    fc3 weight: U(-0.003, 0.003), biases: nn.Linear default U(+/-1/sqrt(fan_in))).

    Matmul weights are stored (in_features, out_features) in bfloat16 and
    zero-padded to the lane-aligned hidden sizes H1P/H2P; biases and the fc3
    row stay f32.  Padding is mathematically inert.
    """
    k1, k2, k3, kb1, kb2, kb3 = jax.random.split(key, 6)

    def xavier_uniform(k, fan_in, fan_out):
        bound = jnp.sqrt(6.0 / (fan_in + fan_out))
        return jax.random.uniform(k, (fan_in, fan_out), jnp.float32,
                                  -bound, bound)

    def linear_bias(k, fan_in, fan_out):
        bound = 1.0 / jnp.sqrt(jnp.asarray(fan_in, jnp.float32))
        return jax.random.uniform(k, (1, fan_out), jnp.float32, -bound, bound)

    def pad_cols(x, new_cols):
        return jnp.pad(x, ((0, 0), (0, new_cols - x.shape[1])))

    def pad_rows(x, new_rows):
        return jnp.pad(x, ((0, new_rows - x.shape[0]), (0, 0)))

    # fc1: state_dim -> 400   (padded to 512 output cols, zeros), bf16 weight
    w1 = pad_cols(xavier_uniform(k1, state_dim, H1), H1P).astype(jnp.bfloat16)
    b1 = pad_cols(linear_bias(kb1, state_dim, H1), H1P)          # (1, 512) f32

    # fc2: (400 + action_dim) -> 300, split into state-half / action-half
    w2 = xavier_uniform(k2, H1 + action_dim, H2)
    w2s = pad_rows(pad_cols(w2[:H1, :], H2P), H1P).astype(jnp.bfloat16)
    w2a = pad_cols(w2[H1:, :], H2P).astype(jnp.bfloat16)         # (A, 384)
    b2 = pad_cols(linear_bias(kb2, H1 + action_dim, H2), H2P)    # (1, 384) f32

    # fc3: 300 -> 1, stored as a padded f32 row (precision kept in f32)
    w3_row = jax.random.uniform(k3, (1, H2), jnp.float32, -0.003, 0.003)
    w3 = pad_cols(w3_row, H2P)                                   # (1, 384) f32
    b3 = linear_bias(kb3, H2, 1)                                 # (1, 1)  f32

    return (w1, b1, w2s, w2a, b2, w3, b3)


def critic_reference(state, action, params):
    """Pure-JAX reference with the SAME bf16-matmul / f32-accumulate math as
    the kernel (padding is zero, so this matches the unpadded PyTorch forward
    up to the intended bf16 weight quantization)."""
    w1, b1, w2s, w2a, b2, w3, b3 = params
    h1 = jnp.maximum(
        jnp.dot(state.astype(jnp.bfloat16), w1,
                preferred_element_type=jnp.float32) + b1, 0.0)
    h2 = jnp.maximum(
        jnp.dot(h1.astype(jnp.bfloat16), w2s,
                preferred_element_type=jnp.float32)
        + jnp.dot(action.astype(jnp.bfloat16), w2a,
                  preferred_element_type=jnp.float32)
        + b2, 0.0)
    return h2 @ w3.T + b3


if __name__ == "__main__":
    key = jax.random.PRNGKey(0)
    k_params, k_state, k_action = jax.random.split(key, 3)

    batch, state_dim, action_dim = 8, 32, 8

    params = init_critic_params(k_params, state_dim, action_dim)
    state = jax.random.normal(k_state, (batch, state_dim), jnp.float32)
    action = jax.random.normal(k_action, (batch, action_dim), jnp.float32)

    out = critic_forward(state, action, params)
    out = jax.block_until_ready(out)

    ref = critic_reference(state, action, params)
    assert out.shape == (batch, 1), out.shape
    assert jnp.allclose(out, ref, atol=1e-3, rtol=1e-3), (out, ref)

    print("KERNEL_OK")
</pallas_src>

<mosaic_0001>
module attributes {stable_mosaic.version = 11 : i64} {
  func.func @_critic_kernel(%arg0: i32, %arg1: memref<8x32xf32, #tpu.memory_space<vmem>>, %arg2: memref<8x8xf32, #tpu.memory_space<vmem>>, %arg3: memref<32x512xbf16, #tpu.memory_space<vmem>>, %arg4: memref<1x512xf32, #tpu.memory_space<vmem>>, %arg5: memref<512x384xbf16, #tpu.memory_space<vmem>>, %arg6: memref<8x384xbf16, #tpu.memory_space<vmem>>, %arg7: memref<1x384xf32, #tpu.memory_space<vmem>>, %arg8: memref<1x384xf32, #tpu.memory_space<vmem>>, %arg9: memref<1x1xf32, #tpu.memory_space<smem>>, %arg10: memref<1x8xf32, #tpu.memory_space<vmem>>) attributes {dimension_semantics = [#tpu.dimension_semantics<parallel>], iteration_bounds = array<i64: 1>, scalar_prefetch = 0 : i64, scratch_operands = 0 : i64, tpu.core_type = #tpu.core_type<tc>, window_params = [{transform_indices = @transform_0, window_bounds = array<i64: 8, 32>}, {transform_indices = @transform_1, window_bounds = array<i64: 8, 8>}, {pipeline_mode = #tpu.pipeline_mode<synchronous>, transform_indices = @transform_2, window_bounds = array<i64: 32, 512>}, {pipeline_mode = #tpu.pipeline_mode<synchronous>, transform_indices = @transform_3, window_bounds = array<i64: 1, 512>}, {pipeline_mode = #tpu.pipeline_mode<synchronous>, transform_indices = @transform_4, window_bounds = array<i64: 512, 384>}, {pipeline_mode = #tpu.pipeline_mode<synchronous>, transform_indices = @transform_5, window_bounds = array<i64: 8, 384>}, {pipeline_mode = #tpu.pipeline_mode<synchronous>, transform_indices = @transform_6, window_bounds = array<i64: 1, 384>}, {pipeline_mode = #tpu.pipeline_mode<synchronous>, transform_indices = @transform_7, window_bounds = array<i64: 1, 384>}, {transform_indices = @transform_8, window_bounds = array<i64: 1, 1>}, {transform_indices = @transform_9, window_bounds = array<i64: 1, 8>}]} {
    %c0 = arith.constant 0 : index
    %c0_0 = arith.constant 0 : index
    %0 = vector.load %arg1[%c0, %c0_0] : memref<8x32xf32, #tpu.memory_space<vmem>>, vector<8x32xf32>
    %1 = arith.truncf %0 : vector<8x32xf32> to vector<8x32xbf16>
    %c0_1 = arith.constant 0 : index
    %c0_2 = arith.constant 0 : index
    %2 = vector.load %arg2[%c0_1, %c0_2] : memref<8x8xf32, #tpu.memory_space<vmem>>, vector<8x8xf32>
    %3 = arith.truncf %2 : vector<8x8xf32> to vector<8x8xbf16>
    %c0_3 = arith.constant 0 : index
    %c0_4 = arith.constant 0 : index
    %4 = vector.load %arg3[%c0_3, %c0_4] : memref<32x512xbf16, #tpu.memory_space<vmem>>, vector<32x512xbf16>
    %cst = arith.constant dense<0.000000e+00> : vector<8x512xf32>
    %5 = tpu.matmul %1, %4, %cst {dimension_numbers = #tpu.dot_dimension_numbers<[1], [0], [0], [1], [0, 0, 1, 1], [], []>} : vector<8x32xbf16>, vector<32x512xbf16>, vector<8x512xf32> -> vector<8x512xf32>
    %c0_5 = arith.constant 0 : index
    %c0_6 = arith.constant 0 : index
    %6 = vector.load %arg4[%c0_5, %c0_6] : memref<1x512xf32, #tpu.memory_space<vmem>>, vector<1x512xf32>
    %7 = vector.broadcast %6 : vector<1x512xf32> to vector<8x512xf32>
    %8 = arith.addf %5, %7 : vector<8x512xf32>
    %cst_7 = arith.constant 0.000000e+00 : f32
    %9 = vector.broadcast %cst_7 : f32 to vector<8x512xf32>
    %10 = arith.maximumf %8, %9 : vector<8x512xf32>
    %11 = arith.truncf %10 : vector<8x512xf32> to vector<8x512xbf16>
    %c0_8 = arith.constant 0 : index
    %c0_9 = arith.constant 0 : index
    %12 = vector.load %arg5[%c0_8, %c0_9] : memref<512x384xbf16, #tpu.memory_space<vmem>>, vector<512x384xbf16>
    %cst_10 = arith.constant dense<0.000000e+00> : vector<8x384xf32>
    %13 = tpu.matmul %11, %12, %cst_10 {dimension_numbers = #tpu.dot_dimension_numbers<[1], [0], [0], [1], [0, 0, 1, 1], [], []>} : vector<8x512xbf16>, vector<512x384xbf16>, vector<8x384xf32> -> vector<8x384xf32>
    %c0_11 = arith.constant 0 : index
    %c0_12 = arith.constant 0 : index
    %14 = vector.load %arg6[%c0_11, %c0_12] : memref<8x384xbf16, #tpu.memory_space<vmem>>, vector<8x384xbf16>
    %cst_13 = arith.constant dense<0.000000e+00> : vector<8x384xf32>
    %15 = tpu.matmul %3, %14, %cst_13 {dimension_numbers = #tpu.dot_dimension_numbers<[1], [0], [0], [1], [0, 0, 1, 1], [], []>} : vector<8x8xbf16>, vector<8x384xbf16>, vector<8x384xf32> -> vector<8x384xf32>
    %16 = arith.addf %13, %15 : vector<8x384xf32>
    %c0_14 = arith.constant 0 : index
    %c0_15 = arith.constant 0 : index
    %17 = vector.load %arg7[%c0_14, %c0_15] : memref<1x384xf32, #tpu.memory_space<vmem>>, vector<1x384xf32>
    %18 = vector.broadcast %17 : vector<1x384xf32> to vector<8x384xf32>
    %19 = arith.addf %16, %18 : vector<8x384xf32>
    %cst_16 = arith.constant 0.000000e+00 : f32
    %20 = vector.broadcast %cst_16 : f32 to vector<8x384xf32>
    %21 = arith.maximumf %19, %20 : vector<8x384xf32>
    %c0_17 = arith.constant 0 : index
    %c0_18 = arith.constant 0 : index
    %22 = vector.load %arg8[%c0_17, %c0_18] : memref<1x384xf32, #tpu.memory_space<vmem>>, vector<1x384xf32>
    %cst_19 = arith.constant dense<0.000000e+00> : vector<1x8xf32>
    %23 = tpu.matmul %22, %21, %cst_19 {dimension_numbers = #tpu.dot_dimension_numbers<[1], [1], [0], [0], [0, 0, 1, 0], [], []>} : vector<1x384xf32>, vector<8x384xf32>, vector<1x8xf32> -> vector<1x8xf32>
    %c0_20 = arith.constant 0 : index
    %c0_21 = arith.constant 0 : index
    %24 = memref.load %arg9[%c0_20, %c0_21] : memref<1x1xf32, #tpu.memory_space<smem>>
    %25 = vector.broadcast %24 : f32 to vector<1x8xf32>
    %26 = arith.addf %23, %25 : vector<1x8xf32>
    %c0_22 = arith.constant 0 : index
    %c0_23 = arith.constant 0 : index
    %27 = vector.load %arg10[%c0_22, %c0_23] : memref<1x8xf32, #tpu.memory_space<vmem>>, vector<1x8xf32>
    tpu.vector_store %arg10[%c0_22, %c0_23], %26 {strides = array<i32>} : memref<1x8xf32, #tpu.memory_space<vmem>>, vector<1x8xf32>,
    return
  }
  func.func @transform_0(%arg0: i32) -> (i32, i32) {
    %c0_i32 = arith.constant 0 : i32
    %c0_i32_0 = arith.constant 0 : i32
    return %arg0, %c0_i32 : i32, i32
  }
  func.func @transform_1(%arg0: i32) -> (i32, i32) {
    %c0_i32 = arith.constant 0 : i32
    %c0_i32_0 = arith.constant 0 : i32
    return %arg0, %c0_i32 : i32, i32
  }
  func.func @transform_2(%arg0: i32) -> (i32, i32) {
    %c0_i32 = arith.constant 0 : i32
    %c0_i32_0 = arith.constant 0 : i32
    %c0_i32_1 = arith.constant 0 : i32
    return %c0_i32, %c0_i32_0 : i32, i32
  }
  func.func @transform_3(%arg0: i32) -> (i32, i32) {
    %c0_i32 = arith.constant 0 : i32
    %c0_i32_0 = arith.constant 0 : i32
    %c0_i32_1 = arith.constant 0 : i32
    return %c0_i32, %c0_i32_0 : i32, i32
  }
  func.func @transform_4(%arg0: i32) -> (i32, i32) {
    %c0_i32 = arith.constant 0 : i32
    %c0_i32_0 = arith.constant 0 : i32
    %c0_i32_1 = arith.constant 0 : i32
    return %c0_i32, %c0_i32_0 : i32, i32
  }
  func.func @transform_5(%arg0: i32) -> (i32, i32) {
    %c0_i32 = arith.constant 0 : i32
    %c0_i32_0 = arith.constant 0 : i32
    %c0_i32_1 = arith.constant 0 : i32
    return %c0_i32, %c0_i32_0 : i32, i32
  }
  func.func @transform_6(%arg0: i32) -> (i32, i32) {
    %c0_i32 = arith.constant 0 : i32
    %c0_i32_0 = arith.constant 0 : i32
    %c0_i32_1 = arith.constant 0 : i32
    return %c0_i32, %c0_i32_0 : i32, i32
  }
  func.func @transform_7(%arg0: i32) -> (i32, i32) {
    %c0_i32 = arith.constant 0 : i32
    %c0_i32_0 = arith.constant 0 : i32
    %c0_i32_1 = arith.constant 0 : i32
    return %c0_i32, %c0_i32_0 : i32, i32
  }
  func.func @transform_8(%arg0: i32) -> (i32, i32) {
    %c0_i32 = arith.constant 0 : i32
    %c0_i32_0 = arith.constant 0 : i32
    %c0_i32_1 = arith.constant 0 : i32
    return %c0_i32, %c0_i32_0 : i32, i32
  }
  func.func @transform_9(%arg0: i32) -> (i32, i32) {
    %c0_i32 = arith.constant 0 : i32
    %c0_i32_0 = arith.constant 0 : i32
    return %c0_i32, %arg0 : i32, i32
  }
}

</mosaic_0001>

<llo_original>
// kernel: tpu_custom_call.1
$region0: #{tpu_custom_call.1}
  #allocation0 [shape = 'u32[]', space=smem, size = 0x4, offset = 0x4, fixed_abs, tag = 'smem constant byte address 0x4 - core index']
  #allocation1 [shape = 'u32[144,128]{1,0:T(1,128)}', space=vmem, size = 0x12000, scoped, tag = 'internal scratch']
  #allocation2 [shape = 'f32[1,1]{1,0:T(1,128)S(6)}', space=smem, size = 0x200, scoped, tag = 'scoped memory for tpu_custom_call.1']
  %s0 = inlined_call_operand.hbm [shape: f32[8,32], index: 0, kind: input, shape index: {}]
  %s1 = inlined_call_operand.hbm [shape: f32[8,8], index: 1, kind: input, shape index: {}]
  %s2 = inlined_call_operand.hbm [shape: bf16[32,512], index: 2, kind: input, shape index: {}]
  %s3 = inlined_call_operand.vmem [shape: f32[1,512], index: 3, kind: input, shape index: {}]
  %s4 = inlined_call_operand.hbm [shape: bf16[512,384], index: 4, kind: input, shape index: {}]
  %s5 = inlined_call_operand.hbm [shape: bf16[8,384], index: 5, kind: input, shape index: {}]
  %s6 = inlined_call_operand.vmem [shape: f32[1,384], index: 6, kind: input, shape index: {}]
  %s7 = inlined_call_operand.vmem [shape: f32[1,384], index: 7, kind: input, shape index: {}]
  %s8 = inlined_call_operand.<no memory space> [shape: f32[1,1], index: 8, kind: input, shape index: {}]
  %s9 = inlined_call_operand.hbm [shape: f32[1,8], index: 9, kind: output, shape index: {}]
  %s10 = sld [smem:[#allocation0]]
  $region66: #{tpu_custom_call.1} parent=0
    _
  %s12 = ssub.s32 1, %s10
  %s13 = scalar_select 0, %s12, %s10
  %14 = sst [smem:[#allocation2]] %s8
  $region1: #{tpu_custom_call.1} parent=0
    #allocation3 [shape = 'u8[4096]{0}', space=vmem, size = 0x1000, scoped, tag = 'input window, operand 0, single buffered']
    #allocation4 [shape = 's32[1]{0}', space=sflag, size = 0x4, scoped, tag = 'scoped memory for tpu_custom_call.1']
    #allocation5 [shape = 's32[1]{0}', space=sflag, size = 0x4, scoped, tag = 'scoped memory for tpu_custom_call.1']
    #allocation6 [shape = 'u8[4096]{0}', space=vmem, size = 0x1000, scoped, tag = 'input window, operand 1, single buffered']
    #allocation7 [shape = 's32[1]{0}', space=sflag, size = 0x4, scoped, tag = 'scoped memory for tpu_custom_call.1']
    #allocation8 [shape = 'u8[32768]{0}', space=vmem, size = 0x8000, scoped, tag = 'input window, operand 2, single buffered']
    #allocation9 [shape = 'u8[393216]{0}', space=vmem, size = 0x60000, scoped, tag = 'input window, operand 4, single buffered']
    #allocation10 [shape = 's32[1]{0}', space=sflag, size = 0x4, scoped, tag = 'scoped memory for tpu_custom_call.1']
    #allocation11 [shape = 'u8[6144]{0}', space=vmem, size = 0x1800, scoped, tag = 'input window, operand 5, single buffered']
    #allocation12 [shape = 'u8[512]{0}', space=vmem, size = 0x400, scoped, tag = 'output window, operand 0, single buffered']
    %15 = vsyncpa [#allocation4], 0
    %16 = vsyncpa [#allocation7], 0
    %17 = vsyncpa [#allocation10], 0
    %18 = vsyncpa [#allocation5], 0
    // Predicated region
    $region2: #{tpu_custom_call.1} parent=1 // pred_check
      _
    $region3: #{tpu_custom_call.1} parent=1 // pred_check_branch
      %20 = sbr.rel (0) target = $region5
    $region4: #{tpu_custom_call.1} parent=1 // pred_region
      %s22 = ssub.s32 128, 128
      %23 = vsyncadd [#allocation4], %s22
      %s25 = sshll.u32 [#allocation3], 4
      %s26 = int_to_ptr.vmem [resolvable:$true] %s25
      %28 = dma.hbm_to_vmem [thread:$0]  %s0, 128, %s26, [#allocation4]
    $region5: #{tpu_custom_call.1} parent=1 // pred_fallthru
      _
    // Predicated region
    $region6: #{tpu_custom_call.1} parent=1 // pred_check
      _
    $region7: #{tpu_custom_call.1} parent=1 // pred_check_branch
      %30 = sbr.rel (0) target = $region9
    $region8: #{tpu_custom_call.1} parent=1 // pred_region
      %s32 = ssub.s32 128, 128
      %33 = vsyncadd [#allocation7], %s32
      %s35 = sshll.u32 [#allocation6], 4
      %s36 = int_to_ptr.vmem [resolvable:$true] %s35
      %38 = dma.hbm_to_vmem [thread:$0]  %s1, 128, %s36, [#allocation7]
    $region9: #{tpu_custom_call.1} parent=1 // pred_fallthru
      _
    // Predicated region
    $region10: #{tpu_custom_call.1} parent=1 // pred_check
      _
    $region11: #{tpu_custom_call.1} parent=1 // pred_check_branch
      %40 = sbr.rel (0) target = $region13
    $region12: #{tpu_custom_call.1} parent=1 // pred_region
      %s42 = ssub.s32 1024, 1024
      %43 = vsyncadd [#allocation7], %s42
      %s44 = sshll.u32 [#allocation8], 4
      %s45 = int_to_ptr.vmem [resolvable:$true] %s44
      %50 = dma.hbm_to_vmem [thread:$0]  %s2, 1024, %s45, [#allocation7], 256, 256, 16
    $region13: #{tpu_custom_call.1} parent=1 // pred_fallthru
      _
    // Predicated region
    $region14: #{tpu_custom_call.1} parent=1 // pred_check
      _
    $region15: #{tpu_custom_call.1} parent=1 // pred_check_branch
      %52 = sbr.rel (0) target = $region17
    $region16: #{tpu_custom_call.1} parent=1 // pred_region
      _
    $region17: #{tpu_custom_call.1} parent=1 // pred_fallthru
      _
    // Predicated region
    $region18: #{tpu_custom_call.1} parent=1 // pred_check
      _
    $region19: #{tpu_custom_call.1} parent=1 // pred_check_branch
      %54 = sbr.rel (0) target = $region21
    $region20: #{tpu_custom_call.1} parent=1 // pred_region
      %s56 = ssub.s32 12288, 12288
      %57 = vsyncadd [#allocation10], %s56
      %s58 = sshll.u32 [#allocation9], 4
      %s59 = int_to_ptr.vmem [resolvable:$true] %s58
      %64 = dma.hbm_to_vmem [thread:$0]  %s4, 12288, %s59, [#allocation10], 192, 192, 12
    $region21: #{tpu_custom_call.1} parent=1 // pred_fallthru
      _
    // Predicated region
    $region22: #{tpu_custom_call.1} parent=1 // pred_check
      _
    $region23: #{tpu_custom_call.1} parent=1 // pred_check_branch
      %66 = sbr.rel (0) target = $region25
    $region24: #{tpu_custom_call.1} parent=1 // pred_region
      %s68 = ssub.s32 192, 192
      %69 = vsyncadd [#allocation10], %s68
      %s71 = sshll.u32 [#allocation11], 4
      %s72 = int_to_ptr.vmem [resolvable:$true] %s71
      %74 = dma.hbm_to_vmem [thread:$0]  %s5, 192, %s72, [#allocation10]
    $region25: #{tpu_custom_call.1} parent=1 // pred_fallthru
      _
    // Predicated region
    $region26: #{tpu_custom_call.1} parent=1 // pred_check
      _
    $region27: #{tpu_custom_call.1} parent=1 // pred_check_branch
      %76 = sbr.rel (0) target = $region29
    $region28: #{tpu_custom_call.1} parent=1 // pred_region
      _
    $region29: #{tpu_custom_call.1} parent=1 // pred_fallthru
      _
    // Predicated region
    $region30: #{tpu_custom_call.1} parent=1 // pred_check
      _
    $region31: #{tpu_custom_call.1} parent=1 // pred_check_branch
      %78 = sbr.rel (0) target = $region33
    $region32: #{tpu_custom_call.1} parent=1 // pred_region
      _
    $region33: #{tpu_custom_call.1} parent=1 // pred_fallthru
      _
    // Predicated region
    $region34: #{tpu_custom_call.1} parent=1 // pred_check
      _
    $region35: #{tpu_custom_call.1} parent=1 // pred_check_branch
      %80 = sbr.rel (0) target = $region37
    $region36: #{tpu_custom_call.1} parent=1 // pred_region
      _
    $region37: #{tpu_custom_call.1} parent=1 // pred_fallthru
      _
    // Predicated region
    $region38: #{tpu_custom_call.1} parent=1 // pred_check
      _
    $region39: #{tpu_custom_call.1} parent=1 // pred_check_branch
      %82 = sbr.rel (0) target = $region41
    $region40: #{tpu_custom_call.1} parent=1 // pred_region
      %83 = dma.done [#allocation4], 128
    $region41: #{tpu_custom_call.1} parent=1 // pred_fallthru
      _
    // Predicated region
    $region42: #{tpu_custom_call.1} parent=1 // pred_check
      _
    $region43: #{tpu_custom_call.1} parent=1 // pred_check_branch
      %85 = sbr.rel (0) target = $region45
    $region44: #{tpu_custom_call.1} parent=1 // pred_region
      %86 = dma.done [#allocation7], 128
    $region45: #{tpu_custom_call.1} parent=1 // pred_fallthru
      _
    // Predicated region
    $region46: #{tpu_custom_call.1} parent=1 // pred_check
      _
    $region47: #{tpu_custom_call.1} parent=1 // pred_check_branch
      %88 = sbr.rel (0) target = $region49
    $region48: #{tpu_custom_call.1} parent=1 // pred_region
      %89 = dma.done [#allocation7], 1024
    $region49: #{tpu_custom_call.1} parent=1 // pred_fallthru
      _
    // Predicated region
    $region50: #{tpu_custom_call.1} parent=1 // pred_check
      _
    $region51: #{tpu_custom_call.1} parent=1 // pred_check_branch
      %91 = sbr.rel (0) target = $region53
    $region52: #{tpu_custom_call.1} parent=1 // pred_region
      %92 = dma.done [#allocation10], 12288
    $region53: #{tpu_custom_call.1} parent=1 // pred_fallthru
      _
    // Predicated region
    $region54: #{tpu_custom_call.1} parent=1 // pred_check
      _
    $region55: #{tpu_custom_call.1} parent=1 // pred_check_branch
      %94 = sbr.rel (0) target = $region57
    $region56: #{tpu_custom_call.1} parent=1 // pred_region
      %95 = dma.done [#allocation10], 192
    $region57: #{tpu_custom_call.1} parent=1 // pred_fallthru
      _
    %v97 = vld [vmem:[#allocation3] sm:$0xff]
    %v98 = vpack.c.bf16 %v97, %v97
    %v99 = vld [vmem:[#allocation6] sm:$0xff]
    %v100 = vpack.c.bf16 %v99, %v99
    %v101 = vld [vmem:[#allocation8] sm:$0xff]
    %v102 = vld [vmem:[#allocation8 + $0x8] sm:$0xff]
    %v103 = vld [vmem:[#allocation8 + $0x10] sm:$0xff]
    %v104 = vld [vmem:[#allocation8 + $0x18] sm:$0xff]
    %v105 = vld [vmem:[#allocation8 + $0x20] sm:$0xff]
    %v106 = vld [vmem:[#allocation8 + $0x28] sm:$0xff]
    %v107 = vld [vmem:[#allocation8 + $0x30] sm:$0xff]
    %v108 = vld [vmem:[#allocation8 + $0x38] sm:$0xff]
    %v109 = vld [vmem:[%s3] sm:$0xf]
    %v111 = vlaneseq
    %v112 = vshrl.u32 %v111, 7
    %v113 = vsub.s32 0, %v112
    %v114 = vrot.slane %v109, %v113
    %v115 = vlaneseq
    %v116 = vshrl.u32 %v115, 7
    %v117 = vsub.s32 1, %v116
    %v118 = vrot.slane %v109, %v117
    %v119 = vlaneseq
    %v120 = vshrl.u32 %v119, 7
    %v121 = vsub.s32 2, %v120
    %v122 = vrot.slane %v109, %v121
    %v123 = vlaneseq
    %v124 = vshrl.u32 %v123, 7
    %v125 = vsub.s32 3, %v124
    %v126 = vrot.slane %v109, %v125
    %v139 = vunpack.c.l.b16 %v101
    %v140 = vunpack.c.h.b16 %v101
    %v141 = vunpack.c.l.b16 %v102
    %v142 = vunpack.c.h.b16 %v102
    %v143 = vunpack.c.l.b16 %v103
    %v144 = vunpack.c.h.b16 %v103
    %v145 = vunpack.c.l.b16 %v104
    %v146 = vunpack.c.h.b16 %v104
    %v147 = vunpack.c.l.b16 %v105
    %v148 = vunpack.c.h.b16 %v105
    %v149 = vunpack.c.l.b16 %v106
    %v150 = vunpack.c.h.b16 %v106
    %v151 = vunpack.c.l.b16 %v107
    %v152 = vunpack.c.h.b16 %v107
    %v153 = vunpack.c.l.b16 %v108
    %v154 = vunpack.c.h.b16 %v108
    %v155 = vpack.c.b16 %v143, %v139
    %v156 = vpack.c.b16 %v144, %v140
    %v157 = vpack.c.b16 %v145, %v141
    %v158 = vpack.c.b16 %v146, %v142
    %v159 = vpack.c.b16 %v151, %v147
    %v160 = vpack.c.b16 %v152, %v148
    %v161 = vpack.c.b16 %v153, %v149
    %v162 = vpack.c.b16 %v154, %v150
    %vm171 = vcmask 261120
    %v173 = vsel %vm171, %v98, 0
    %175 = vmatprep.subr.bf16.mxu0 0
    %176 = vmatpush1.bf16.msra.mxu0 0
    %177 = vmatprep.subr.bf16.mxu0 0
    %178 = vmatpush1.bf16.msra.mxu0 0
    %179 = vmatprep.subr.bf16.mxu0 0
    %180 = vmatpush1.bf16.msra.mxu0 0
    %181 = vmatprep.subr.bf16.mxu0 0
    %182 = vmatpush1.bf16.msra.mxu0 0
    %183 = vmatprep.subr.bf16.mxu0 0
    %184 = vmatpush1.bf16.msra.mxu0 0
    %185 = vmatprep.subr.bf16.mxu0 0
    %186 = vmatpush1.bf16.msra.mxu0 0
    %187 = vmatprep.subr.bf16.mxu0 %v160
    %188 = vmatpush1.bf16.msra.mxu0 %v159
    %189 = vmatprep.subr.bf16.mxu0 %v156
    %190 = vmatpush1.bf16.msra.mxu0 %v155
    %191 = vmatprep.subr.bf16.mxu0 0
    %192 = vmatpush2.bf16.msra.mxu0 0
    %193 = vmatprep.subr.bf16.mxu0 0
    %194 = vmatpush2.bf16.msra.mxu0 0
    %195 = vmatprep.subr.bf16.mxu0 0
    %196 = vmatpush2.bf16.msra.mxu0 0
    %197 = vmatprep.subr.bf16.mxu0 0
    %198 = vmatpush2.bf16.msra.mxu0 0
    %199 = vmatprep.subr.bf16.mxu0 0
    %200 = vmatpush2.bf16.msra.mxu0 0
    %201 = vmatprep.subr.bf16.mxu0 0
    %202 = vmatpush2.bf16.msra.mxu0 0
    %203 = vmatprep.subr.bf16.mxu0 0
    %204 = vmatpush2.bf16.msra.mxu0 0
    %205 = vmatprep.subr.bf16.mxu0 0
    %206 = vmatpush2.bf16.msra.mxu0 0
    %207 = vmatprep.mubr.bf16.mxu0 0
    %208 = vmatmul.mubr.bf16.gmra.mxu0 %v173
    %v209 = vpop.f32.mrf.mxu0
    %v210 = vadd.f32 %v114, %v209
    %v211 = vpop.f32.mrf.mxu0
    %v212 = vadd.f32 %v118, %v211
    %v213 = vpop.f32.mrf.mxu0
    %v214 = vpop.f32.mrf.mxu0
    %215 = vdwg.mxu0
    %216 = vmatprep.subr.bf16.mxu0 0
    %217 = vmatpush1.bf16.msra.mxu0 0
    %218 = vmatprep.subr.bf16.mxu0 0
    %219 = vmatpush1.bf16.msra.mxu0 0
    %220 = vmatprep.subr.bf16.mxu0 0
    %221 = vmatpush1.bf16.msra.mxu0 0
    %222 = vmatprep.subr.bf16.mxu0 0
    %223 = vmatpush1.bf16.msra.mxu0 0
    %224 = vmatprep.subr.bf16.mxu0 0
    %225 = vmatpush1.bf16.msra.mxu0 0
    %226 = vmatprep.subr.bf16.mxu0 0
    %227 = vmatpush1.bf16.msra.mxu0 0
    %228 = vmatprep.subr.bf16.mxu0 %v162
    %229 = vmatpush1.bf16.msra.mxu0 %v161
    %230 = vmatprep.subr.bf16.mxu0 %v158
    %231 = vmatpush1.bf16.msra.mxu0 %v157
    %232 = vmatprep.subr.bf16.mxu0 0
    %233 = vmatpush2.bf16.msra.mxu0 0
    %234 = vmatprep.subr.bf16.mxu0 0
    %235 = vmatpush2.bf16.msra.mxu0 0
    %236 = vmatprep.subr.bf16.mxu0 0
    %237 = vmatpush2.bf16.msra.mxu0 0
    %238 = vmatprep.subr.bf16.mxu0 0
    %239 = vmatpush2.bf16.msra.mxu0 0
    %240 = vmatprep.subr.bf16.mxu0 0
    %241 = vmatpush2.bf16.msra.mxu0 0
    %242 = vmatprep.subr.bf16.mxu0 0
    %243 = vmatpush2.bf16.msra.mxu0 0
    %244 = vmatprep.subr.bf16.mxu0 0
    %245 = vmatpush2.bf16.msra.mxu0 0
    %246 = vmatprep.subr.bf16.mxu0 0
    %247 = vmatpush2.bf16.msra.mxu0 0
    %248 = vmatprep.mubr.bf16.mxu0 0
    %249 = vmatmul.mubr.bf16.gmra.mxu0 %v173
    %v250 = vpop.f32.mrf.mxu0
    %v251 = vadd.f32 %v122, %v250
    %v252 = vpop.f32.mrf.mxu0
    %v253 = vadd.f32 %v126, %v252
    %v254 = vpop.f32.mrf.mxu0
    %v255 = vpop.f32.mrf.mxu0
    %256 = vdwg.mxu0
    %v257 = vmax.f32 %v210, 0.0
    %v258 = vmax.f32 %v212, 0.0
    %v259 = vmax.f32 %v251, 0.0
    %v260 = vmax.f32 %v253, 0.0
    %v261 = vpack.c.bf16 %v257, %v257
    %v262 = vpack.c.bf16 %v258, %v258
    %v263 = vpack.c.bf16 %v259, %v259
    %v264 = vpack.c.bf16 %v260, %v260
    %v265 = vld [vmem:[#allocation9] sm:$0xff]
    %v266 = vld [vmem:[#allocation9 + $0x8] sm:$0xf]
    %v267 = vld [vmem:[#allocation9 + $0xc] sm:$0xff]
    %v268 = vld [vmem:[#allocation9 + $0x14] sm:$0xf]
    %v269 = vld [vmem:[#allocation9 + $0x18] sm:$0xff]
    %v270 = vld [vmem:[#allocation9 + $0x20] sm:$0xf]
    %v271 = vld [vmem:[#allocation9 + $0x24] sm:$0xff]
    %v272 = vld [vmem:[#allocation9 + $0x2c] sm:$0xf]
    %v273 = vld [vmem:[#allocation9 + $0x30] sm:$0xff]
    %v274 = vld [vmem:[#allocation9 + $0x38] sm:$0xf]
    %v275 = vld [vmem:[#allocation9 + $0x3c] sm:$0xff]
    %v276 = vld [vmem:[#allocation9 + $0x44] sm:$0xf]
    %v277 = vld [vmem:[#allocation9 + $0x48] sm:$0xff]
    %v278 = vld [vmem:[#allocation9 + $0x50] sm:$0xf]
    %v279 = vld [vmem:[#allocation9 + $0x54] sm:$0xff]
    %v280 = vld [vmem:[#allocation9 + $0x5c] sm:$0xf]
    %v281 = vld [vmem:[#allocation9 + $0x60] sm:$0xff]
    %v282 = vld [vmem:[#allocation9 + $0x68] sm:$0xf]
    %v283 = vld [vmem:[#allocation9 + $0x6c] sm:$0xff]
    %v284 = vld [vmem:[#allocation9 + $0x74] sm:$0xf]
    %v285 = vld [vmem:[#allocation9 + $0x78] sm:$0xff]
    %v286 = vld [vmem:[#allocation9 + $0x80] sm:$0xf]
    %v287 = vld [vmem:[#allocation9 + $0x84] sm:$0xff]
    %v288 = vld [vmem:[#allocation9 + $0x8c] sm:$0xf]
    %v289 = vld [vmem:[#allocation9 + $0x90] sm:$0xff]
    %v290 = vld [vmem:[#allocation9 + $0x98] sm:$0xf]
    %v291 = vld [vmem:[#allocation9 + $0x9c] sm:$0xff]
    %v292 = vld [vmem:[#allocation9 + $0xa4] sm:$0xf]
    %v293 = vld [vmem:[#allocation9 + $0xa8] sm:$0xff]
    %v294 = vld [vmem:[#allocation9 + $0xb0] sm:$0xf]
    %v295 = vld [vmem:[#allocation9 + $0xb4] sm:$0xff]
    %v296 = vld [vmem:[#allocation9 + $0xbc] sm:$0xf]
    %v297 = vld [vmem:[#allocation9 + $0xc0] sm:$0xff]
    %v298 = vld [vmem:[#allocation9 + $0xc8] sm:$0xf]
    %v299 = vld [vmem:[#allocation9 + $0xcc] sm:$0xff]
    %v300 = vld [vmem:[#allocation9 + $0xd4] sm:$0xf]
    %v301 = vld [vmem:[#allocation9 + $0xd8] sm:$0xff]
    %v302 = vld [vmem:[#allocation9 + $0xe0] sm:$0xf]
    %v303 = vld [vmem:[#allocation9 + $0xe4] sm:$0xff]
    %v304 = vld [vmem:[#allocation9 + $0xec] sm:$0xf]
    %v305 = vld [vmem:[#allocation9 + $0xf0] sm:$0xff]
    %v306 = vld [vmem:[#allocation9 + $0xf8] sm:$0xf]
    %v307 = vld [vmem:[#allocation9 + $0xfc] sm:$0xff]
    %v308 = vld [vmem:[#allocation9 + $0x104] sm:$0xf]
    %v309 = vld [vmem:[#allocation9 + $0x108] sm:$0xff]
    %v310 = vld [vmem:[#allocation9 + $0x110] sm:$0xf]
    %v311 = vld [vmem:[#allocation9 + $0x114] sm:$0xff]
    %v312 = vld [vmem:[#allocation9 + $0x11c] sm:$0xf]
    %v313 = vld [vmem:[#allocation9 + $0x120] sm:$0xff]
    %v314 = vld [vmem:[#allocation9 + $0x128] sm:$0xf]
    %v315 = vld [vmem:[#allocation9 + $0x12c] sm:$0xff]
    %v316 = vld [vmem:[#allocation9 + $0x134] sm:$0xf]
    %v317 = vld [vmem:[#allocation9 + $0x138] sm:$0xff]
    %v318 = vld [vmem:[#allocation9 + $0x140] sm:$0xf]
    %v319 = vld [vmem:[#allocation9 + $0x144] sm:$0xff]
    %v320 = vld [vmem:[#allocation9 + $0x14c] sm:$0xf]
    %v321 = vld [vmem:[#allocation9 + $0x150] sm:$0xff]
    %v322 = vld [vmem:[#allocation9 + $0x158] sm:$0xf]
    %v323 = vld [vmem:[#allocation9 + $0x15c] sm:$0xff]
    %v324 = vld [vmem:[#allocation9 + $0x164] sm:$0xf]
    %v325 = vld [vmem:[#allocation9 + $0x168] sm:$0xff]
    %v326 = vld [vmem:[#allocation9 + $0x170] sm:$0xf]
    %v327 = vld [vmem:[#allocation9 + $0x174] sm:$0xff]
    %v328 = vld [vmem:[#allocation9 + $0x17c] sm:$0xf]
    %v329 = vld [vmem:[#allocation9 + $0x180] sm:$0xff]
    %v330 = vld [vmem:[#allocation9 + $0x188] sm:$0xf]
    %v331 = vld [vmem:[#allocation9 + $0x18c] sm:$0xff]
    %v332 = vld [vmem:[#allocation9 + $0x194] sm:$0xf]
    %v333 = vld [vmem:[#allocation9 + $0x198] sm:$0xff]
    %v334 = vld [vmem:[#allocation9 + $0x1a0] sm:$0xf]
    %v335 = vld [vmem:[#allocation9 + $0x1a4] sm:$0xff]
    %v336 = vld [vmem:[#allocation9 + $0x1ac] sm:$0xf]
    %v337 = vld [vmem:[#allocation9 + $0x1b0] sm:$0xff]
    %v338 = vld [vmem:[#allocation9 + $0x1b8] sm:$0xf]
    %v339 = vld [vmem:[#allocation9 + $0x1bc] sm:$0xff]
    %v340 = vld [vmem:[#allocation9 + $0x1c4] sm:$0xf]
    %v341 = vld [vmem:[#allocation9 + $0x1c8] sm:$0xff]
    %v342 = vld [vmem:[#allocation9 + $0x1d0] sm:$0xf]
    %v343 = vld [vmem:[#allocation9 + $0x1d4] sm:$0xff]
    %v344 = vld [vmem:[#allocation9 + $0x1dc] sm:$0xf]
    %v345 = vld [vmem:[#allocation9 + $0x1e0] sm:$0xff]
    %v346 = vld [vmem:[#allocation9 + $0x1e8] sm:$0xf]
    %v347 = vld [vmem:[#allocation9 + $0x1ec] sm:$0xff]
    %v348 = vld [vmem:[#allocation9 + $0x1f4] sm:$0xf]
    %v349 = vld [vmem:[#allocation9 + $0x1f8] sm:$0xff]
    %v350 = vld [vmem:[#allocation9 + $0x200] sm:$0xf]
    %v351 = vld [vmem:[#allocation9 + $0x204] sm:$0xff]
    %v352 = vld [vmem:[#allocation9 + $0x20c] sm:$0xf]
    %v353 = vld [vmem:[#allocation9 + $0x210] sm:$0xff]
    %v354 = vld [vmem:[#allocation9 + $0x218] sm:$0xf]
    %v355 = vld [vmem:[#allocation9 + $0x21c] sm:$0xff]
    %v356 = vld [vmem:[#allocation9 + $0x224] sm:$0xf]
    %v357 = vld [vmem:[#allocation9 + $0x228] sm:$0xff]
    %v358 = vld [vmem:[#allocation9 + $0x230] sm:$0xf]
    %v359 = vld [vmem:[#allocation9 + $0x234] sm:$0xff]
    %v360 = vld [vmem:[#allocation9 + $0x23c] sm:$0xf]
    %v361 = vld [vmem:[#allocation9 + $0x240] sm:$0xff]
    %v362 = vld [vmem:[#allocation9 + $0x248] sm:$0xf]
    %v363 = vld [vmem:[#allocation9 + $0x24c] sm:$0xff]
    %v364 = vld [vmem:[#allocation9 + $0x254] sm:$0xf]
    %v365 = vld [vmem:[#allocation9 + $0x258] sm:$0xff]
    %v366 = vld [vmem:[#allocation9 + $0x260] sm:$0xf]
    %v367 = vld [vmem:[#allocation9 + $0x264] sm:$0xff]
    %v368 = vld [vmem:[#allocation9 + $0x26c] sm:$0xf]
    %v369 = vld [vmem:[#allocation9 + $0x270] sm:$0xff]
    %v370 = vld [vmem:[#allocation9 + $0x278] sm:$0xf]
    %v371 = vld [vmem:[#allocation9 + $0x27c] sm:$0xff]
    %v372 = vld [vmem:[#allocation9 + $0x284] sm:$0xf]
    %v373 = vld [vmem:[#allocation9 + $0x288] sm:$0xff]
    %v374 = vld [vmem:[#allocation9 + $0x290] sm:$0xf]
    %v375 = vld [vmem:[#allocation9 + $0x294] sm:$0xff]
    %v376 = vld [vmem:[#allocation9 + $0x29c] sm:$0xf]
    %v377 = vld [vmem:[#allocation9 + $0x2a0] sm:$0xff]
    %v378 = vld [vmem:[#allocation9 + $0x2a8] sm:$0xf]
    %v379 = vld [vmem:[#allocation9 + $0x2ac] sm:$0xff]
    %v380 = vld [vmem:[#allocation9 + $0x2b4] sm:$0xf]
    %v381 = vld [vmem:[#allocation9 + $0x2b8] sm:$0xff]
    %v382 = vld [vmem:[#allocation9 + $0x2c0] sm:$0xf]
    %v383 = vld [vmem:[#allocation9 + $0x2c4] sm:$0xff]
    %v384 = vld [vmem:[#allocation9 + $0x2cc] sm:$0xf]
    %v385 = vld [vmem:[#allocation9 + $0x2d0] sm:$0xff]
    %v386 = vld [vmem:[#allocation9 + $0x2d8] sm:$0xf]
    %v387 = vld [vmem:[#allocation9 + $0x2dc] sm:$0xff]
    %v388 = vld [vmem:[#allocation9 + $0x2e4] sm:$0xf]
    %v389 = vld [vmem:[#allocation9 + $0x2e8] sm:$0xff]
    %v390 = vld [vmem:[#allocation9 + $0x2f0] sm:$0xf]
    %v391 = vld [vmem:[#allocation9 + $0x2f4] sm:$0xff]
    %v392 = vld [vmem:[#allocation9 + $0x2fc] sm:$0xf]
    %v393 = vld [vmem:[#allocation11] sm:$0xff]
    %v394 = vld [vmem:[#allocation11 + $0x8] sm:$0xf]
    %v397 = vunpack.c.l.b16 %v393
    %v398 = vunpack.c.h.b16 %v393
    %v399 = vunpack.c.l.b16 %v394
    %v400 = vpack.c.b16 %v397, %v397
    %v401 = vpack.c.b16 %v398, %v398
    %v402 = vpack.c.b16 %v399, %v399
    %vm403 = vcmask 64512
    %v405 = vsel %vm403, %v100, 0
    %vm407 = vcmask 1043456
    %v409 = vsel %vm407, %v400, 0
    %v412 = vsel %vm407, %v401, 0
    %v415 = vsel %vm407, %v402, 0
    %417 = vmatprep.subr.bf16.mxu0 0
    %418 = vmatpush1.bf16.msra.mxu0 0
    %419 = vmatprep.subr.bf16.mxu0 0
    %420 = vmatpush1.bf16.msra.mxu0 0
    %421 = vmatprep.subr.bf16.mxu0 0
    %422 = vmatpush1.bf16.msra.mxu0 0
    %423 = vmatprep.subr.bf16.mxu0 0
    %424 = vmatpush1.bf16.msra.mxu0 0
    %425 = vmatprep.subr.bf16.mxu0 0
    %426 = vmatpush1.bf16.msra.mxu0 0
    %427 = vmatprep.subr.bf16.mxu0 0
    %428 = vmatpush1.bf16.msra.mxu0 0
    %429 = vmatprep.subr.bf16.mxu0 0
    %430 = vmatpush1.bf16.msra.mxu0 0
    %431 = vmatprep.subr.bf16.mxu0 %v412
    %432 = vmatpush1.bf16.msra.mxu0 %v409
    %433 = vmatprep.subr.bf16.mxu0 0
    %434 = vmatpush2.bf16.msra.mxu0 0
    %435 = vmatprep.subr.bf16.mxu0 0
    %436 = vmatpush2.bf16.msra.mxu0 0
    %437 = vmatprep.subr.bf16.mxu0 0
    %438 = vmatpush2.bf16.msra.mxu0 0
    %439 = vmatprep.subr.bf16.mxu0 0
    %440 = vmatpush2.bf16.msra.mxu0 0
    %441 = vmatprep.subr.bf16.mxu0 0
    %442 = vmatpush2.bf16.msra.mxu0 0
    %443 = vmatprep.subr.bf16.mxu0 0
    %444 = vmatpush2.bf16.msra.mxu0 0
    %445 = vmatprep.subr.bf16.mxu0 0
    %446 = vmatpush2.bf16.msra.mxu0 0
    %447 = vmatprep.subr.bf16.mxu0 0
    %448 = vmatpush2.bf16.msra.mxu0 0
    %449 = vmatprep.mubr.bf16.mxu0 0
    %450 = vmatmul.mubr.bf16.gmra.mxu0 %v405
    %v451 = vpop.f32.mrf.mxu0
    %v452 = vadd.f32 0.0, %v451
    %v453 = vpop.f32.mrf.mxu0
    %v454 = vadd.f32 0.0, %v453
    %v455 = vpop.f32.mrf.mxu0
    %v456 = vpop.f32.mrf.mxu0
    %457 = vdwg.mxu0
    %458 = vmatprep.subr.bf16.mxu0 0
    %459 = vmatpush1.bf16.msra.mxu0 0
    %460 = vmatprep.subr.bf16.mxu0 0
    %461 = vmatpush1.bf16.msra.mxu0 0
    %462 = vmatprep.subr.bf16.mxu0 0
    %463 = vmatpush1.bf16.msra.mxu0 0
    %464 = vmatprep.subr.bf16.mxu0 0
    %465 = vmatpush1.bf16.msra.mxu0 0
    %466 = vmatprep.subr.bf16.mxu0 0
    %467 = vmatpush1.bf16.msra.mxu0 0
    %468 = vmatprep.subr.bf16.mxu0 0
    %469 = vmatpush1.bf16.msra.mxu0 0
    %470 = vmatprep.subr.bf16.mxu0 0
    %471 = vmatpush1.bf16.msra.mxu0 0
    %472 = vmatprep.subr.bf16.mxu0 0
    %473 = vmatpush1.bf16.msra.mxu0 %v415
    %474 = vmatprep.subr.bf16.mxu0 0
    %475 = vmatpush2.bf16.msra.mxu0 0
    %476 = vmatprep.subr.bf16.mxu0 0
    %477 = vmatpush2.bf16.msra.mxu0 0
    %478 = vmatprep.subr.bf16.mxu0 0
    %479 = vmatpush2.bf16.msra.mxu0 0
    %480 = vmatprep.subr.bf16.mxu0 0
    %481 = vmatpush2.bf16.msra.mxu0 0
    %482 = vmatprep.subr.bf16.mxu0 0
    %483 = vmatpush2.bf16.msra.mxu0 0
    %484 = vmatprep.subr.bf16.mxu0 0
    %485 = vmatpush2.bf16.msra.mxu0 0
    %486 = vmatprep.subr.bf16.mxu0 0
    %487 = vmatpush2.bf16.msra.mxu0 0
    %488 = vmatprep.subr.bf16.mxu0 0
    %489 = vmatpush2.bf16.msra.mxu0 0
    %490 = vmatprep.mubr.bf16.mxu0 0
    %491 = vmatmul.mubr.bf16.gmra.mxu0 %v405
    %v492 = vpop.f32.mrf.mxu0
    %v493 = vadd.f32 0.0, %v492
    %v494 = vpop.f32.mrf.mxu0
    %v495 = vpop.f32.mrf.mxu0
    %v496 = vpop.f32.mrf.mxu0
    %497 = vdwg.mxu0
    %v626 = vunpack.c.l.b16 %v265
    %v627 = vunpack.c.h.b16 %v265
    %v628 = vunpack.c.l.b16 %v266
    %v629 = vunpack.c.l.b16 %v267
    %v630 = vunpack.c.h.b16 %v267
    %v631 = vunpack.c.l.b16 %v268
    %v632 = vunpack.c.l.b16 %v269
    %v633 = vunpack.c.h.b16 %v269
    %v634 = vunpack.c.l.b16 %v270
    %v635 = vunpack.c.l.b16 %v271
    %v636 = vunpack.c.h.b16 %v271
    %v637 = vunpack.c.l.b16 %v272
    %v638 = vunpack.c.l.b16 %v273
    %v639 = vunpack.c.h.b16 %v273
    %v640 = vunpack.c.l.b16 %v274
    %v641 = vunpack.c.l.b16 %v275
    %v642 = vunpack.c.h.b16 %v275
    %v643 = vunpack.c.l.b16 %v276
    %v644 = vunpack.c.l.b16 %v277
    %v645 = vunpack.c.h.b16 %v277
    %v646 = vunpack.c.l.b16 %v278
    %v647 = vunpack.c.l.b16 %v279
    %v648 = vunpack.c.h.b16 %v279
    %v649 = vunpack.c.l.b16 %v280
    %v650 = vunpack.c.l.b16 %v281
    %v651 = vunpack.c.h.b16 %v281
    %v652 = vunpack.c.l.b16 %v282
    %v653 = vunpack.c.l.b16 %v283
    %v654 = vunpack.c.h.b16 %v283
    %v655 = vunpack.c.l.b16 %v284
    %v656 = vunpack.c.l.b16 %v285
    %v657 = vunpack.c.h.b16 %v285
    %v658 = vunpack.c.l.b16 %v286
    %v659 = vunpack.c.l.b16 %v287
    %v660 = vunpack.c.h.b16 %v287
    %v661 = vunpack.c.l.b16 %v288
    %v662 = vunpack.c.l.b16 %v289
    %v663 = vunpack.c.h.b16 %v289
    %v664 = vunpack.c.l.b16 %v290
    %v665 = vunpack.c.l.b16 %v291
    %v666 = vunpack.c.h.b16 %v291
    %v667 = vunpack.c.l.b16 %v292
    %v668 = vunpack.c.l.b16 %v293
    %v669 = vunpack.c.h.b16 %v293
    %v670 = vunpack.c.l.b16 %v294
    %v671 = vunpack.c.l.b16 %v295
    %v672 = vunpack.c.h.b16 %v295
    %v673 = vunpack.c.l.b16 %v296
    %v674 = vunpack.c.l.b16 %v297
    %v675 = vunpack.c.h.b16 %v297
    %v676 = vunpack.c.l.b16 %v298
    %v677 = vunpack.c.l.b16 %v299
    %v678 = vunpack.c.h.b16 %v299
    %v679 = vunpack.c.l.b16 %v300
    %v680 = vunpack.c.l.b16 %v301
    %v681 = vunpack.c.h.b16 %v301
    %v682 = vunpack.c.l.b16 %v302
    %v683 = vunpack.c.l.b16 %v303
    %v684 = vunpack.c.h.b16 %v303
    %v685 = vunpack.c.l.b16 %v304
    %v686 = vunpack.c.l.b16 %v305
    %v687 = vunpack.c.h.b16 %v305
    %v688 = vunpack.c.l.b16 %v306
    %v689 = vunpack.c.l.b16 %v307
    %v690 = vunpack.c.h.b16 %v307
    %v691 = vunpack.c.l.b16 %v308
    %v692 = vunpack.c.l.b16 %v309
    %v693 = vunpack.c.h.b16 %v309
    %v694 = vunpack.c.l.b16 %v310
    %v695 = vunpack.c.l.b16 %v311
    %v696 = vunpack.c.h.b16 %v311
    %v697 = vunpack.c.l.b16 %v312
    %v698 = vunpack.c.l.b16 %v313
    %v699 = vunpack.c.h.b16 %v313
    %v700 = vunpack.c.l.b16 %v314
    %v701 = vunpack.c.l.b16 %v315
    %v702 = vunpack.c.h.b16 %v315
    %v703 = vunpack.c.l.b16 %v316
    %v704 = vunpack.c.l.b16 %v317
    %v705 = vunpack.c.h.b16 %v317
    %v706 = vunpack.c.l.b16 %v318
    %v707 = vunpack.c.l.b16 %v319
    %v708 = vunpack.c.h.b16 %v319
    %v709 = vunpack.c.l.b16 %v320
    %v710 = vunpack.c.l.b16 %v321
    %v711 = vunpack.c.h.b16 %v321
    %v712 = vunpack.c.l.b16 %v322
    %v713 = vunpack.c.l.b16 %v323
    %v714 = vunpack.c.h.b16 %v323
    %v715 = vunpack.c.l.b16 %v324
    %v716 = vunpack.c.l.b16 %v325
    %v717 = vunpack.c.h.b16 %v325
    %v718 = vunpack.c.l.b16 %v326
    %v719 = vunpack.c.l.b16 %v327
    %v720 = vunpack.c.h.b16 %v327
    %v721 = vunpack.c.l.b16 %v328
    %v722 = vunpack.c.l.b16 %v329
    %v723 = vunpack.c.h.b16 %v329
    %v724 = vunpack.c.l.b16 %v330
    %v725 = vunpack.c.l.b16 %v331
    %v726 = vunpack.c.h.b16 %v331
    %v727 = vunpack.c.l.b16 %v332
    %v728 = vunpack.c.l.b16 %v333
    %v729 = vunpack.c.h.b16 %v333
    %v730 = vunpack.c.l.b16 %v334
    %v731 = vunpack.c.l.b16 %v335
    %v732 = vunpack.c.h.b16 %v335
    %v733 = vunpack.c.l.b16 %v336
    %v734 = vunpack.c.l.b16 %v337
    %v735 = vunpack.c.h.b16 %v337
    %v736 = vunpack.c.l.b16 %v338
    %v737 = vunpack.c.l.b16 %v339
    %v738 = vunpack.c.h.b16 %v339
    %v739 = vunpack.c.l.b16 %v340
    %v740 = vunpack.c.l.b16 %v341
    %v741 = vunpack.c.h.b16 %v341
    %v742 = vunpack.c.l.b16 %v342
    %v743 = vunpack.c.l.b16 %v343
    %v744 = vunpack.c.h.b16 %v343
    %v745 = vunpack.c.l.b16 %v344
    %v746 = vunpack.c.l.b16 %v345
    %v747 = vunpack.c.h.b16 %v345
    %v748 = vunpack.c.l.b16 %v346
    %v749 = vunpack.c.l.b16 %v347
    %v750 = vunpack.c.h.b16 %v347
    %v751 = vunpack.c.l.b16 %v348
    %v752 = vunpack.c.l.b16 %v349
    %v753 = vunpack.c.h.b16 %v349
    %v754 = vunpack.c.l.b16 %v350
    %v755 = vunpack.c.l.b16 %v351
    %v756 = vunpack.c.h.b16 %v351
    %v757 = vunpack.c.l.b16 %v352
    %v758 = vunpack.c.l.b16 %v353
    %v759 = vunpack.c.h.b16 %v353
    %v760 = vunpack.c.l.b16 %v354
    %v761 = vunpack.c.l.b16 %v355
    %v762 = vunpack.c.h.b16 %v355
    %v763 = vunpack.c.l.b16 %v356
    %v764 = vunpack.c.l.b16 %v357
    %v765 = vunpack.c.h.b16 %v357
    %v766 = vunpack.c.l.b16 %v358
    %v767 = vunpack.c.l.b16 %v359
    %v768 = vunpack.c.h.b16 %v359
    %v769 = vunpack.c.l.b16 %v360
    %v770 = vunpack.c.l.b16 %v361
    %v771 = vunpack.c.h.b16 %v361
    %v772 = vunpack.c.l.b16 %v362
    %v773 = vunpack.c.l.b16 %v363
    %v774 = vunpack.c.h.b16 %v363
    %v775 = vunpack.c.l.b16 %v364
    %v776 = vunpack.c.l.b16 %v365
    %v777 = vunpack.c.h.b16 %v365
    %v778 = vunpack.c.l.b16 %v366
    %v779 = vunpack.c.l.b16 %v367
    %v780 = vunpack.c.h.b16 %v367
    %v781 = vunpack.c.l.b16 %v368
    %v782 = vunpack.c.l.b16 %v369
    %v783 = vunpack.c.h.b16 %v369
    %v784 = vunpack.c.l.b16 %v370
    %v785 = vunpack.c.l.b16 %v371
    %v786 = vunpack.c.h.b16 %v371
    %v787 = vunpack.c.l.b16 %v372
    %v788 = vunpack.c.l.b16 %v373
    %v789 = vunpack.c.h.b16 %v373
    %v790 = vunpack.c.l.b16 %v374
    %v791 = vunpack.c.l.b16 %v375
    %v792 = vunpack.c.h.b16 %v375
    %v793 = vunpack.c.l.b16 %v376
    %v794 = vunpack.c.l.b16 %v377
    %v795 = vunpack.c.h.b16 %v377
    %v796 = vunpack.c.l.b16 %v378
    %v797 = vunpack.c.l.b16 %v379
    %v798 = vunpack.c.h.b16 %v379
    %v799 = vunpack.c.l.b16 %v380
    %v800 = vunpack.c.l.b16 %v381
    %v801 = vunpack.c.h.b16 %v381
    %v802 = vunpack.c.l.b16 %v382
    %v803 = vunpack.c.l.b16 %v383
    %v804 = vunpack.c.h.b16 %v383
    %v805 = vunpack.c.l.b16 %v384
    %v806 = vunpack.c.l.b16 %v385
    %v807 = vunpack.c.h.b16 %v385
    %v808 = vunpack.c.l.b16 %v386
    %v809 = vunpack.c.l.b16 %v387
    %v810 = vunpack.c.h.b16 %v387
    %v811 = vunpack.c.l.b16 %v388
    %v812 = vunpack.c.l.b16 %v389
    %v813 = vunpack.c.h.b16 %v389
    %v814 = vunpack.c.l.b16 %v390
    %v815 = vunpack.c.l.b16 %v391
    %v816 = vunpack.c.h.b16 %v391
    %v817 = vunpack.c.l.b16 %v392
    %v818 = vpack.c.b16 %v629, %v626
    %v819 = vpack.c.b16 %v630, %v627
    %v820 = vpack.c.b16 %v631, %v628
    %v821 = vpack.c.b16 %v635, %v632
    %v822 = vpack.c.b16 %v636, %v633
    %v823 = vpack.c.b16 %v637, %v634
    %v824 = vpack.c.b16 %v641, %v638
    %v825 = vpack.c.b16 %v642, %v639
    %v826 = vpack.c.b16 %v643, %v640
    %v827 = vpack.c.b16 %v647, %v644
    %v828 = vpack.c.b16 %v648, %v645
    %v829 = vpack.c.b16 %v649, %v646
    %v830 = vpack.c.b16 %v653, %v650
    %v831 = vpack.c.b16 %v654, %v651
    %v832 = vpack.c.b16 %v655, %v652
    %v833 = vpack.c.b16 %v659, %v656
    %v834 = vpack.c.b16 %v660, %v657
    %v835 = vpack.c.b16 %v661, %v658
    %v836 = vpack.c.b16 %v665, %v662
    %v837 = vpack.c.b16 %v666, %v663
    %v838 = vpack.c.b16 %v667, %v664
    %v839 = vpack.c.b16 %v671, %v668
    %v840 = vpack.c.b16 %v672, %v669
    %v841 = vpack.c.b16 %v673, %v670
    %v842 = vpack.c.b16 %v677, %v674
    %v843 = vpack.c.b16 %v678, %v675
    %v844 = vpack.c.b16 %v679, %v676
    %v845 = vpack.c.b16 %v683, %v680
    %v846 = vpack.c.b16 %v684, %v681
    %v847 = vpack.c.b16 %v685, %v682
    %v848 = vpack.c.b16 %v689, %v686
    %v849 = vpack.c.b16 %v690, %v687
    %v850 = vpack.c.b16 %v691, %v688
    %v851 = vpack.c.b16 %v695, %v692
    %v852 = vpack.c.b16 %v696, %v693
    %v853 = vpack.c.b16 %v697, %v694
    %v854 = vpack.c.b16 %v701, %v698
    %v855 = vpack.c.b16 %v702, %v699
    %v856 = vpack.c.b16 %v703, %v700
    %v857 = vpack.c.b16 %v707, %v704
    %v858 = vpack.c.b16 %v708, %v705
    %v859 = vpack.c.b16 %v709, %v706
    %v860 = vpack.c.b16 %v713, %v710
    %v861 = vpack.c.b16 %v714, %v711
    %v862 = vpack.c.b16 %v715, %v712
    %v863 = vpack.c.b16 %v719, %v716
    %v864 = vpack.c.b16 %v720, %v717
    %v865 = vpack.c.b16 %v721, %v718
    %v866 = vpack.c.b16 %v725, %v722
    %v867 = vpack.c.b16 %v726, %v723
    %v868 = vpack.c.b16 %v727, %v724
    %v869 = vpack.c.b16 %v731, %v728
    %v870 = vpack.c.b16 %v732, %v729
    %v871 = vpack.c.b16 %v733, %v730
    %v872 = vpack.c.b16 %v737, %v734
    %v873 = vpack.c.b16 %v738, %v735
    %v874 = vpack.c.b16 %v739, %v736
    %v875 = vpack.c.b16 %v743, %v740
    %v876 = vpack.c.b16 %v744, %v741
    %v877 = vpack.c.b16 %v745, %v742
    %v878 = vpack.c.b16 %v749, %v746
    %v879 = vpack.c.b16 %v750, %v747
    %v880 = vpack.c.b16 %v751, %v748
    %v881 = vpack.c.b16 %v755, %v752
    %v882 = vpack.c.b16 %v756, %v753
    %v883 = vpack.c.b16 %v757, %v754
    %v884 = vpack.c.b16 %v761, %v758
    %v885 = vpack.c.b16 %v762, %v759
    %v886 = vpack.c.b16 %v763, %v760
    %v887 = vpack.c.b16 %v767, %v764
    %v888 = vpack.c.b16 %v768, %v765
    %v889 = vpack.c.b16 %v769, %v766
    %v890 = vpack.c.b16 %v773, %v770
    %v891 = vpack.c.b16 %v774, %v771
    %v892 = vpack.c.b16 %v775, %v772
    %v893 = vpack.c.b16 %v779, %v776
    %v894 = vpack.c.b16 %v780, %v777
    %v895 = vpack.c.b16 %v781, %v778
    %v896 = vpack.c.b16 %v785, %v782
    %v897 = vpack.c.b16 %v786, %v783
    %v898 = vpack.c.b16 %v787, %v784
    %v899 = vpack.c.b16 %v791, %v788
    %v900 = vpack.c.b16 %v792, %v789
    %v901 = vpack.c.b16 %v793, %v790
    %v902 = vpack.c.b16 %v797, %v794
    %v903 = vpack.c.b16 %v798, %v795
    %v904 = vpack.c.b16 %v799, %v796
    %v905 = vpack.c.b16 %v803, %v800
    %v906 = vpack.c.b16 %v804, %v801
    %v907 = vpack.c.b16 %v805, %v802
    %v908 = vpack.c.b16 %v809, %v806
    %v909 = vpack.c.b16 %v810, %v807
    %v910 = vpack.c.b16 %v811, %v808
    %v911 = vpack.c.b16 %v815, %v812
    %v912 = vpack.c.b16 %v816, %v813
    %v913 = vpack.c.b16 %v817, %v814
    %1010 = vmatprep.subr.bf16.mxu0 %v840
    %1011 = vmatpush1.bf16.msra.mxu0 %v839
    %1012 = vmatprep.subr.bf16.mxu0 %v837
    %1013 = vmatpush1.bf16.msra.mxu0 %v836
    %1014 = vmatprep.subr.bf16.mxu0 %v834
    %1015 = vmatpush1.bf16.msra.mxu0 %v833
    %1016 = vmatprep.subr.bf16.mxu0 %v831
    %1017 = vmatpush1.bf16.msra.mxu0 %v830
    %1018 = vmatprep.subr.bf16.mxu0 %v828
    %1019 = vmatpush1.bf16.msra.mxu0 %v827
    %1020 = vmatprep.subr.bf16.mxu0 %v825
    %1021 = vmatpush1.bf16.msra.mxu0 %v824
    %1022 = vmatprep.subr.bf16.mxu0 %v822
    %1023 = vmatpush1.bf16.msra.mxu0 %v821
    %1024 = vmatprep.subr.bf16.mxu0 %v819
    %1025 = vmatpush1.bf16.msra.mxu0 %v818
    %1026 = vmatprep.subr.bf16.mxu0 %v864
    %1027 = vmatpush2.bf16.msra.mxu0 %v863
    %1028 = vmatprep.subr.bf16.mxu0 %v861
    %1029 = vmatpush2.bf16.msra.mxu0 %v860
    %1030 = vmatprep.subr.bf16.mxu0 %v858
    %1031 = vmatpush2.bf16.msra.mxu0 %v857
    %1032 = vmatprep.subr.bf16.mxu0 %v855
    %1033 = vmatpush2.bf16.msra.mxu0 %v854
    %1034 = vmatprep.subr.bf16.mxu0 %v852
    %1035 = vmatpush2.bf16.msra.mxu0 %v851
    %1036 = vmatprep.subr.bf16.mxu0 %v849
    %1037 = vmatpush2.bf16.msra.mxu0 %v848
    %1038 = vmatprep.subr.bf16.mxu0 %v846
    %1039 = vmatpush2.bf16.msra.mxu0 %v845
    %1040 = vmatprep.subr.bf16.mxu0 %v843
    %1041 = vmatpush2.bf16.msra.mxu0 %v842
    %1042 = vmatprep.mubr.bf16.mxu0 %v262
    %1043 = vmatmul.mubr.bf16.gmra.mxu0 %v261
    %v1044 = vpop.f32.mrf.mxu0
    %v1045 = vadd.f32 %v452, %v1044
    %v1046 = vpop.f32.mrf.mxu0
    %v1047 = vadd.f32 %v454, %v1046
    %v1048 = vpop.f32.mrf.mxu0
    %v1049 = vpop.f32.mrf.mxu0
    %1050 = vdwg.mxu0
    %1051 = vmatprep.subr.bf16.mxu0 %v888
    %1052 = vmatpush1.bf16.msra.mxu0 %v887
    %1053 = vmatprep.subr.bf16.mxu0 %v885
    %1054 = vmatpush1.bf16.msra.mxu0 %v884
    %1055 = vmatprep.subr.bf16.mxu0 %v882
    %1056 = vmatpush1.bf16.msra.mxu0 %v881
    %1057 = vmatprep.subr.bf16.mxu0 %v879
    %1058 = vmatpush1.bf16.msra.mxu0 %v878
    %1059 = vmatprep.subr.bf16.mxu0 %v876
    %1060 = vmatpush1.bf16.msra.mxu0 %v875
    %1061 = vmatprep.subr.bf16.mxu0 %v873
    %1062 = vmatpush1.bf16.msra.mxu0 %v872
    %1063 = vmatprep.subr.bf16.mxu0 %v870
    %1064 = vmatpush1.bf16.msra.mxu0 %v869
    %1065 = vmatprep.subr.bf16.mxu0 %v867
    %1066 = vmatpush1.bf16.msra.mxu0 %v866
    %1067 = vmatprep.subr.bf16.mxu0 %v912
    %1068 = vmatpush2.bf16.msra.mxu0 %v911
    %1069 = vmatprep.subr.bf16.mxu0 %v909
    %1070 = vmatpush2.bf16.msra.mxu0 %v908
    %1071 = vmatprep.subr.bf16.mxu0 %v906
    %1072 = vmatpush2.bf16.msra.mxu0 %v905
    %1073 = vmatprep.subr.bf16.mxu0 %v903
    %1074 = vmatpush2.bf16.msra.mxu0 %v902
    %1075 = vmatprep.subr.bf16.mxu0 %v900
    %1076 = vmatpush2.bf16.msra.mxu0 %v899
    %1077 = vmatprep.subr.bf16.mxu0 %v897
    %1078 = vmatpush2.bf16.msra.mxu0 %v896
    %1079 = vmatprep.subr.bf16.mxu0 %v894
    %1080 = vmatpush2.bf16.msra.mxu0 %v893
    %1081 = vmatprep.subr.bf16.mxu0 %v891
    %1082 = vmatpush2.bf16.msra.mxu0 %v890
    %1083 = vmatprep.mubr.bf16.mxu0 %v264
    %1084 = vmatmul.mubr.bf16.gmra.mxu0 %v263
    %v1085 = vpop.f32.mrf.mxu0
    %v1086 = vadd.f32 %v1045, %v1085
    %v1087 = vpop.f32.mrf.mxu0
    %v1088 = vadd.f32 %v1047, %v1087
    %v1089 = vpop.f32.mrf.mxu0
    %v1090 = vpop.f32.mrf.mxu0
    %1091 = vdwg.mxu0
    %1092 = vmatprep.subr.bf16.mxu0 0
    %1093 = vmatpush1.bf16.msra.mxu0 %v841
    %1094 = vmatprep.subr.bf16.mxu0 0
    %1095 = vmatpush1.bf16.msra.mxu0 %v838
    %1096 = vmatprep.subr.bf16.mxu0 0
    %1097 = vmatpush1.bf16.msra.mxu0 %v835
    %1098 = vmatprep.subr.bf16.mxu0 0
    %1099 = vmatpush1.bf16.msra.mxu0 %v832
    %1100 = vmatprep.subr.bf16.mxu0 0
    %1101 = vmatpush1.bf16.msra.mxu0 %v829
    %1102 = vmatprep.subr.bf16.mxu0 0
    %1103 = vmatpush1.bf16.msra.mxu0 %v826
    %1104 = vmatprep.subr.bf16.mxu0 0
    %1105 = vmatpush1.bf16.msra.mxu0 %v823
    %1106 = vmatprep.subr.bf16.mxu0 0
    %1107 = vmatpush1.bf16.msra.mxu0 %v820
    %1108 = vmatprep.subr.bf16.mxu0 0
    %1109 = vmatpush2.bf16.msra.mxu0 %v865
    %1110 = vmatprep.subr.bf16.mxu0 0
    %1111 = vmatpush2.bf16.msra.mxu0 %v862
    %1112 = vmatprep.subr.bf16.mxu0 0
    %1113 = vmatpush2.bf16.msra.mxu0 %v859
    %1114 = vmatprep.subr.bf16.mxu0 0
    %1115 = vmatpush2.bf16.msra.mxu0 %v856
    %1116 = vmatprep.subr.bf16.mxu0 0
    %1117 = vmatpush2.bf16.msra.mxu0 %v853
    %1118 = vmatprep.subr.bf16.mxu0 0
    %1119 = vmatpush2.bf16.msra.mxu0 %v850
    %1120 = vmatprep.subr.bf16.mxu0 0
    %1121 = vmatpush2.bf16.msra.mxu0 %v847
    %1122 = vmatprep.subr.bf16.mxu0 0
    %1123 = vmatpush2.bf16.msra.mxu0 %v844
    %1124 = vmatprep.mubr.bf16.mxu0 %v262
    %1125 = vmatmul.mubr.bf16.gmra.mxu0 %v261
    %v1126 = vpop.f32.mrf.mxu0
    %v1127 = vadd.f32 %v493, %v1126
    %v1128 = vpop.f32.mrf.mxu0
    %v1129 = vpop.f32.mrf.mxu0
    %v1130 = vpop.f32.mrf.mxu0
    %1131 = vdwg.mxu0
    %1132 = vmatprep.subr.bf16.mxu0 0
    %1133 = vmatpush1.bf16.msra.mxu0 %v889
    %1134 = vmatprep.subr.bf16.mxu0 0
    %1135 = vmatpush1.bf16.msra.mxu0 %v886
    %1136 = vmatprep.subr.bf16.mxu0 0
    %1137 = vmatpush1.bf16.msra.mxu0 %v883
    %1138 = vmatprep.subr.bf16.mxu0 0
    %1139 = vmatpush1.bf16.msra.mxu0 %v880
    %1140 = vmatprep.subr.bf16.mxu0 0
    %1141 = vmatpush1.bf16.msra.mxu0 %v877
    %1142 = vmatprep.subr.bf16.mxu0 0
    %1143 = vmatpush1.bf16.msra.mxu0 %v874
    %1144 = vmatprep.subr.bf16.mxu0 0
    %1145 = vmatpush1.bf16.msra.mxu0 %v871
    %1146 = vmatprep.subr.bf16.mxu0 0
    %1147 = vmatpush1.bf16.msra.mxu0 %v868
    %1148 = vmatprep.subr.bf16.mxu0 0
    %1149 = vmatpush2.bf16.msra.mxu0 %v913
    %1150 = vmatprep.subr.bf16.mxu0 0
    %1151 = vmatpush2.bf16.msra.mxu0 %v910
    %1152 = vmatprep.subr.bf16.mxu0 0
    %1153 = vmatpush2.bf16.msra.mxu0 %v907
    %1154 = vmatprep.subr.bf16.mxu0 0
    %1155 = vmatpush2.bf16.msra.mxu0 %v904
    %1156 = vmatprep.subr.bf16.mxu0 0
    %1157 = vmatpush2.bf16.msra.mxu0 %v901
    %1158 = vmatprep.subr.bf16.mxu0 0
    %1159 = vmatpush2.bf16.msra.mxu0 %v898
    %1160 = vmatprep.subr.bf16.mxu0 0
    %1161 = vmatpush2.bf16.msra.mxu0 %v895
    %1162 = vmatprep.subr.bf16.mxu0 0
    %1163 = vmatpush2.bf16.msra.mxu0 %v892
    %1164 = vmatprep.mubr.bf16.mxu0 %v264
    %1165 = vmatmul.mubr.bf16.gmra.mxu0 %v263
    %v1166 = vpop.f32.mrf.mxu0
    %v1167 = vadd.f32 %v1127, %v1166
    %v1168 = vpop.f32.mrf.mxu0
    %v1169 = vpop.f32.mrf.mxu0
    %v1170 = vpop.f32.mrf.mxu0
    %1171 = vdwg.mxu0
    %v1172 = vld [vmem:[%s6] sm:$0x7]
    %v1174 = vlaneseq
    %v1175 = vshrl.u32 %v1174, 7
    %v1176 = vsub.s32 0, %v1175
    %v1177 = vrot.slane %v1172, %v1176
    %v1178 = vlaneseq
    %v1179 = vshrl.u32 %v1178, 7
    %v1180 = vsub.s32 1, %v1179
    %v1181 = vrot.slane %v1172, %v1180
    %v1182 = vlaneseq
    %v1183 = vshrl.u32 %v1182, 7
    %v1184 = vsub.s32 2, %v1183
    %v1185 = vrot.slane %v1172, %v1184
    %v1189 = vadd.f32 %v1086, %v1177
    %v1190 = vadd.f32 %v1088, %v1181
    %v1191 = vadd.f32 %v1167, %v1185
    %v1192 = vmax.f32 %v1189, 0.0
    %v1193 = vmax.f32 %v1190, 0.0
    %v1194 = vmax.f32 %v1191, 0.0
    %v1195 = vld [vmem:[%s7] sm:$0x7]
    %s1196 = sld [smem:[#allocation2]]
    %v1197 = vstv %s1196
    %v1199 = vlaneseq
    %v1200 = vshrl.u32 %v1199, 7
    %v1201 = vsub.s32 0, %v1200
    %v1202 = vrot.slane %v1195, %v1201
    %v1203 = vlaneseq
    %v1204 = vshrl.u32 %v1203, 7
    %v1205 = vsub.s32 1, %v1204
    %v1206 = vrot.slane %v1195, %v1205
    %v1207 = vlaneseq
    %v1208 = vshrl.u32 %v1207, 7
    %v1209 = vsub.s32 2, %v1208
    %v1210 = vrot.slane %v1195, %v1209
    %1214 = vmatprep.subr.mxu0 0.0
    %1215 = vmatpush1.xpose.msra.mxu0 0.0
    %1216 = vmatprep.subr.mxu0 0.0
    %1217 = vmatpush1.xpose.msra.mxu0 0.0
    %1218 = vmatprep.subr.mxu0 0.0
    %1219 = vmatpush1.xpose.msra.mxu0 0.0
    %1220 = vmatprep.subr.mxu0 0.0
    %1221 = vmatpush1.xpose.msra.mxu0 0.0
    %1222 = vmatprep.subr.mxu0 0.0
    %1223 = vmatpush1.xpose.msra.mxu0 0.0
    %1224 = vmatprep.subr.mxu0 0.0
    %1225 = vmatpush1.xpose.msra.mxu0 0.0
    %1226 = vmatprep.subr.mxu0 0.0
    %1227 = vmatpush1.xpose.msra.mxu0 0.0
    %1228 = vmatprep.subr.mxu0 0.0
    %1229 = vmatpush1.xpose.msra.mxu0 0.0
    %1230 = vmatprep.subr.mxu0 0.0
    %1231 = vmatpush1.xpose.msra.mxu0 0.0
    %1232 = vmatprep.subr.mxu0 0.0
    %1233 = vmatpush1.xpose.msra.mxu0 0.0
    %1234 = vmatprep.subr.mxu0 0.0
    %1235 = vmatpush1.xpose.msra.mxu0 0.0
    %1236 = vmatprep.subr.mxu0 0.0
    %1237 = vmatpush1.xpose.msra.mxu0 0.0
    %1238 = vmatprep.subr.mxu0 0.0
    %1239 = vmatpush1.xpose.msra.mxu0 0.0
    %1240 = vmatprep.subr.mxu0 0.0
    %1241 = vmatpush1.xpose.msra.mxu0 0.0
    %1242 = vmatprep.subr.mxu0 0.0
    %1243 = vmatpush1.xpose.msra.mxu0 0.0
    %1244 = vmatprep.subr.mxu0 %v1193
    %1245 = vmatpush1.xpose.msra.mxu0 %v1192
    %1246 = vmatprep.subr.mxu0 0.0
    %1247 = vmatpush2.xpose.msra.mxu0 0.0
    %1248 = vmatprep.subr.mxu0 0.0
    %1249 = vmatpush2.xpose.msra.mxu0 0.0
    %1250 = vmatprep.subr.mxu0 0.0
    %1251 = vmatpush2.xpose.msra.mxu0 0.0
    %1252 = vmatprep.subr.mxu0 0.0
    %1253 = vmatpush2.xpose.msra.mxu0 0.0
    %1254 = vmatprep.subr.mxu0 0.0
    %1255 = vmatpush2.xpose.msra.mxu0 0.0
    %1256 = vmatprep.subr.mxu0 0.0
    %1257 = vmatpush2.xpose.msra.mxu0 0.0
    %1258 = vmatprep.subr.mxu0 0.0
    %1259 = vmatpush2.xpose.msra.mxu0 0.0
    %1260 = vmatprep.subr.mxu0 0.0
    %1261 = vmatpush2.xpose.msra.mxu0 0.0
    %1262 = vmatprep.subr.mxu0 0.0
    %1263 = vmatpush2.xpose.msra.mxu0 0.0
    %1264 = vmatprep.subr.mxu0 0.0
    %1265 = vmatpush2.xpose.msra.mxu0 0.0
    %1266 = vmatprep.subr.mxu0 0.0
    %1267 = vmatpush2.xpose.msra.mxu0 0.0
    %1268 = vmatprep.subr.mxu0 0.0
    %1269 = vmatpush2.xpose.msra.mxu0 0.0
    %1270 = vmatprep.subr.mxu0 0.0
    %1271 = vmatpush2.xpose.msra.mxu0 0.0
    %1272 = vmatprep.subr.mxu0 0.0
    %1273 = vmatpush2.xpose.msra.mxu0 0.0
    %1274 = vmatprep.subr.mxu0 0.0
    %1275 = vmatpush2.xpose.msra.mxu0 0.0
    %1276 = vmatprep.subr.mxu0 0.0
    %1277 = vmatpush2.xpose.msra.mxu0 0.0
    %1278 = vmatprep.mubr.f32.mxu0 %v1206
    %1279 = vmatmul.mubr.f32.gmra.mxu0 %v1202
    %v1280 = vpop.f32.mrf.mxu0
    %v1281 = vadd.f32 %v1197, %v1280
    %v1282 = vpop.f32.mrf.mxu0
    %1283 = vdwg.mxu0
    %1284 = vmatprep.subr.mxu0 0.0
    %1285 = vmatpush1.xpose.msra.mxu0 0.0
    %1286 = vmatprep.subr.mxu0 0.0
    %1287 = vmatpush1.xpose.msra.mxu0 0.0
    %1288 = vmatprep.subr.mxu0 0.0
    %1289 = vmatpush1.xpose.msra.mxu0 0.0
    %1290 = vmatprep.subr.mxu0 0.0
    %1291 = vmatpush1.xpose.msra.mxu0 0.0
    %1292 = vmatprep.subr.mxu0 0.0
    %1293 = vmatpush1.xpose.msra.mxu0 0.0
    %1294 = vmatprep.subr.mxu0 0.0
    %1295 = vmatpush1.xpose.msra.mxu0 0.0
    %1296 = vmatprep.subr.mxu0 0.0
    %1297 = vmatpush1.xpose.msra.mxu0 0.0
    %1298 = vmatprep.subr.mxu0 0.0
    %1299 = vmatpush1.xpose.msra.mxu0 0.0
    %1300 = vmatprep.subr.mxu0 0.0
    %1301 = vmatpush1.xpose.msra.mxu0 0.0
    %1302 = vmatprep.subr.mxu0 0.0
    %1303 = vmatpush1.xpose.msra.mxu0 0.0
    %1304 = vmatprep.subr.mxu0 0.0
    %1305 = vmatpush1.xpose.msra.mxu0 0.0
    %1306 = vmatprep.subr.mxu0 0.0
    %1307 = vmatpush1.xpose.msra.mxu0 0.0
    %1308 = vmatprep.subr.mxu0 0.0
    %1309 = vmatpush1.xpose.msra.mxu0 0.0
    %1310 = vmatprep.subr.mxu0 0.0
    %1311 = vmatpush1.xpose.msra.mxu0 0.0
    %1312 = vmatprep.subr.mxu0 0.0
    %1313 = vmatpush1.xpose.msra.mxu0 0.0
    %1314 = vmatprep.subr.mxu0 0.0
    %1315 = vmatpush1.xpose.msra.mxu0 %v1194
    %1316 = vmatprep.subr.mxu0 0.0
    %1317 = vmatpush2.xpose.msra.mxu0 0.0
    %1318 = vmatprep.subr.mxu0 0.0
    %1319 = vmatpush2.xpose.msra.mxu0 0.0
    %1320 = vmatprep.subr.mxu0 0.0
    %1321 = vmatpush2.xpose.msra.mxu0 0.0
    %1322 = vmatprep.subr.mxu0 0.0
    %1323 = vmatpush2.xpose.msra.mxu0 0.0
    %1324 = vmatprep.subr.mxu0 0.0
    %1325 = vmatpush2.xpose.msra.mxu0 0.0
    %1326 = vmatprep.subr.mxu0 0.0
    %1327 = vmatpush2.xpose.msra.mxu0 0.0
    %1328 = vmatprep.subr.mxu0 0.0
    %1329 = vmatpush2.xpose.msra.mxu0 0.0
    %1330 = vmatprep.subr.mxu0 0.0
    %1331 = vmatpush2.xpose.msra.mxu0 0.0
    %1332 = vmatprep.subr.mxu0 0.0
    %1333 = vmatpush2.xpose.msra.mxu0 0.0
    %1334 = vmatprep.subr.mxu0 0.0
    %1335 = vmatpush2.xpose.msra.mxu0 0.0
    %1336 = vmatprep.subr.mxu0 0.0
    %1337 = vmatpush2.xpose.msra.mxu0 0.0
    %1338 = vmatprep.subr.mxu0 0.0
    %1339 = vmatpush2.xpose.msra.mxu0 0.0
    %1340 = vmatprep.subr.mxu0 0.0
    %1341 = vmatpush2.xpose.msra.mxu0 0.0
    %1342 = vmatprep.subr.mxu0 0.0
    %1343 = vmatpush2.xpose.msra.mxu0 0.0
    %1344 = vmatprep.subr.mxu0 0.0
    %1345 = vmatpush2.xpose.msra.mxu0 0.0
    %1346 = vmatprep.subr.mxu0 0.0
    %1347 = vmatpush2.xpose.msra.mxu0 0.0
    %1348 = vmatprep.mubr.f32.mxu0 0.0
    %1349 = vmatmul.mubr.f32.gmra.mxu0 %v1210
    %v1350 = vpop.f32.mrf.mxu0
    %v1351 = vadd.f32 %v1281, %v1350
    %v1352 = vpop.f32.mrf.mxu0
    %1353 = vdwg.mxu0
    %vm1354 = vcmask 57344
    %1355 = vst.msk [vmem:[#allocation12] sm:$0x1] %vm1354, %v1351
    // Predicated region
    $region58: #{tpu_custom_call.1} parent=1 // pred_check
      _
    $region59: #{tpu_custom_call.1} parent=1 // pred_check_branch
      %1357 = sbr.rel (0) target = $region61
    $region60: #{tpu_custom_call.1} parent=1 // pred_region
      %s1359 = ssub.s32 16, 16
      %1360 = vsyncadd [#allocation5], %s1359
      %s1362 = sshll.u32 [#allocation12], 4
      %s1363 = int_to_ptr.vmem [resolvable:$true] %s1362
      %1365 = dma.vmem_to_hbm [thread:$0]  %s1363, 16, %s9, [#allocation5]
    $region61: #{tpu_custom_call.1} parent=1 // pred_fallthru
      _
    // Predicated region
    $region62: #{tpu_custom_call.1} parent=1 // pred_check
      _
    $region63: #{tpu_custom_call.1} parent=1 // pred_check_branch
      %1367 = sbr.rel (0) target = $region65
    $region64: #{tpu_custom_call.1} parent=1 // pred_region
      %1368 = dma.done [#allocation5], 16
    $region65: #{tpu_custom_call.1} parent=1 // pred_fallthru
      _
    %1369 = vsyncpa [#allocation4], 1
    %1370 = vsyncpa [#allocation7], 1
    %1371 = vsyncpa [#allocation10], 1
    %1372 = vsyncpa [#allocation5], 1

</llo_original>
